<compile_context>
chip_gen: v5e
topology: v5e:2x2
jax: 0.10.0
libtpu: 0.0.40
codegen_flags: <defaults>
</compile_context>

<pallas_src>
import jax
import jax.numpy as jnp
from jax.experimental import pallas as pl
from jax.experimental.pallas import tpu as pltpu


def _round_up(n, m):
    return ((n + m - 1) // m) * m


def _mlp_kernel(x_ref, w1_ref, b1_ref, w2_ref, b2_ref, w3_ref, b3_ref, o_ref):
    # layer 1: input Linear + ReLU (f32 operands, f32 accumulation)
    h1 = jnp.dot(x_ref[...], w1_ref[...], preferred_element_type=jnp.float32)
    h1 = jnp.maximum(h1 + b1_ref[...], 0.0)
    # layer 2: hidden1 Linear (bias added, then ReLU — matches PyTorch forward)
    h2 = jnp.dot(h1, w2_ref[...], preferred_element_type=jnp.float32) + b2_ref[...]
    h2 = jnp.maximum(h2, 0.0)
    # layer 3: output Linear, compact out_dim columns (dense HBM writeback)
    out = jnp.dot(h2, w3_ref[...], preferred_element_type=jnp.float32) + b3_ref[...]
    o_ref[...] = out.astype(o_ref.dtype)


def simple_ann_forward(x, params, *, max_batch_tile=4096):
    """x: (B, input_size) f32. params: dict of w1,b1,w2,b2,w3,b3 (f32)."""
    w1, b1, w2, b2, w3, b3 = (params[k] for k in ("w1", "b1", "w2", "b2", "w3", "b3"))
    B, in_dim = x.shape
    hidden = w1.shape[1]
    out_dim = w3.shape[1]

    # Tile selection from the tile count: waste <= ~8 rows per tile, and for
    # moderate batches keep >= 2 grid steps so v7x's second TensorCore gets
    # work via the "parallel" batch axis (a 1-step grid leaves one TC idle).
    min_tiles = 2 if B >= 128 else 1
    n_tiles = max(pl.cdiv(B, max_batch_tile), min_tiles)
    TB = _round_up(pl.cdiv(B, n_tiles), 8)
    B_pad = n_tiles * TB
    if B_pad != B:
        x = jnp.pad(x, ((0, B_pad - B), (0, 0)))

    grid = (n_tiles,)

    flops = 2 * B_pad * (in_dim * hidden + hidden * hidden + hidden * out_dim)
    bytes_accessed = (
        B_pad * in_dim * 4                      # x (f32)
        + B_pad * out_dim * 4                   # output (f32, compact)
        + (in_dim * hidden + hidden * hidden + hidden * out_dim) * 4  # weights
        + (hidden + hidden + out_dim) * 4       # biases
    )

    out = pl.pallas_call(
        _mlp_kernel,
        out_shape=jax.ShapeDtypeStruct((B_pad, out_dim), jnp.float32),
        grid=grid,
        in_specs=[
            pl.BlockSpec((TB, in_dim), lambda i: (i, 0)),       # x tile (pipelined)
            pl.BlockSpec((in_dim, hidden), lambda i: (0, 0)),   # weights stay resident
            pl.BlockSpec((1, hidden), lambda i: (0, 0)),
            pl.BlockSpec((hidden, hidden), lambda i: (0, 0)),
            pl.BlockSpec((1, hidden), lambda i: (0, 0)),
            pl.BlockSpec((hidden, out_dim), lambda i: (0, 0)),
            pl.BlockSpec((1, out_dim), lambda i: (0, 0)),
        ],
        out_specs=pl.BlockSpec((TB, out_dim), lambda i: (i, 0)),
        compiler_params=pltpu.CompilerParams(
            dimension_semantics=("parallel",)),
        cost_estimate=pl.CostEstimate(
            flops=flops, transcendentals=0, bytes_accessed=bytes_accessed),
    )(x, w1, b1, w2, b2, w3, b3)

    # Slice off batch padding; .view(batch_size, -1) is a no-op here.
    return out[:B] if B_pad != B else out


def init_params(key, input_size, output_size, hidden_dim):
    """Deterministic init mirroring nn.Linear's U(-1/sqrt(fan_in), 1/sqrt(fan_in))."""
    ks = jax.random.split(key, 6)

    def linear(kw, kb, fan_in, fan_out):
        bound = 1.0 / jnp.sqrt(jnp.float32(fan_in))
        w = jax.random.uniform(kw, (fan_in, fan_out), jnp.float32, -bound, bound)
        b = jax.random.uniform(kb, (1, fan_out), jnp.float32, -bound, bound)
        return w, b

    w1, b1 = linear(ks[0], ks[1], input_size, hidden_dim)
    w2, b2 = linear(ks[2], ks[3], hidden_dim, hidden_dim)
    w3, b3 = linear(ks[4], ks[5], hidden_dim, output_size)
    return {"w1": w1, "b1": b1, "w2": w2, "b2": b2, "w3": w3, "b3": b3}


def _reference_f32(x, p):
    h1 = jnp.maximum(x @ p["w1"] + p["b1"], 0.0)
    h2 = h1 @ p["w2"] + p["b2"]
    return jnp.maximum(h2, 0.0) @ p["w3"] + p["b3"]


if __name__ == "__main__":
    key = jax.random.PRNGKey(0)
    k_x, k_p = jax.random.split(key)

    batch, input_size, hidden_dim, output_size = 8, 32, 32, 16
    x = jax.random.normal(k_x, (batch, input_size), jnp.float32)
    params = init_params(k_p, input_size, output_size, hidden_dim)

    out = jax.block_until_ready(simple_ann_forward(x, params))
    assert out.shape == (batch, output_size)

    ref = _reference_f32(x, params)
    # Loose tolerance to accommodate MXU default-precision f32 matmuls on TPU.
    assert jnp.allclose(out, ref, atol=2e-2, rtol=2e-2), \
        float(jnp.max(jnp.abs(out - ref)))
    print("KERNEL_OK")
</pallas_src>

<mosaic_0001>
module attributes {stable_mosaic.version = 11 : i64} {
  func.func @_mlp_kernel(%arg0: i32, %arg1: memref<8x32xf32, #tpu.memory_space<vmem>>, %arg2: memref<32x32xf32, #tpu.memory_space<vmem>>, %arg3: memref<1x32xf32, #tpu.memory_space<vmem>>, %arg4: memref<32x32xf32, #tpu.memory_space<vmem>>, %arg5: memref<1x32xf32, #tpu.memory_space<vmem>>, %arg6: memref<32x16xf32, #tpu.memory_space<vmem>>, %arg7: memref<1x16xf32, #tpu.memory_space<vmem>>, %arg8: memref<8x16xf32, #tpu.memory_space<vmem>>) attributes {dimension_semantics = [#tpu.dimension_semantics<parallel>], iteration_bounds = array<i64: 1>, scalar_prefetch = 0 : i64, scratch_operands = 0 : i64, tpu.core_type = #tpu.core_type<tc>, window_params = [{transform_indices = @transform_0, window_bounds = array<i64: 8, 32>}, {pipeline_mode = #tpu.pipeline_mode<synchronous>, transform_indices = @transform_1, window_bounds = array<i64: 32, 32>}, {pipeline_mode = #tpu.pipeline_mode<synchronous>, transform_indices = @transform_2, window_bounds = array<i64: 1, 32>}, {pipeline_mode = #tpu.pipeline_mode<synchronous>, transform_indices = @transform_3, window_bounds = array<i64: 32, 32>}, {pipeline_mode = #tpu.pipeline_mode<synchronous>, transform_indices = @transform_4, window_bounds = array<i64: 1, 32>}, {pipeline_mode = #tpu.pipeline_mode<synchronous>, transform_indices = @transform_5, window_bounds = array<i64: 32, 16>}, {pipeline_mode = #tpu.pipeline_mode<synchronous>, transform_indices = @transform_6, window_bounds = array<i64: 1, 16>}, {transform_indices = @transform_7, window_bounds = array<i64: 8, 16>}]} {
    %c0 = arith.constant 0 : index
    %c0_0 = arith.constant 0 : index
    %0 = vector.load %arg1[%c0, %c0_0] : memref<8x32xf32, #tpu.memory_space<vmem>>, vector<8x32xf32>
    %c0_1 = arith.constant 0 : index
    %c0_2 = arith.constant 0 : index
    %1 = vector.load %arg2[%c0_1, %c0_2] : memref<32x32xf32, #tpu.memory_space<vmem>>, vector<32x32xf32>
    %cst = arith.constant dense<0.000000e+00> : vector<8x32xf32>
    %2 = tpu.matmul %0, %1, %cst {dimension_numbers = #tpu.dot_dimension_numbers<[1], [0], [0], [1], [0, 0, 1, 1], [], []>} : vector<8x32xf32>, vector<32x32xf32>, vector<8x32xf32> -> vector<8x32xf32>
    %c0_3 = arith.constant 0 : index
    %c0_4 = arith.constant 0 : index
    %3 = vector.load %arg3[%c0_3, %c0_4] : memref<1x32xf32, #tpu.memory_space<vmem>>, vector<1x32xf32>
    %4 = vector.broadcast %3 : vector<1x32xf32> to vector<8x32xf32>
    %5 = arith.addf %2, %4 : vector<8x32xf32>
    %cst_5 = arith.constant 0.000000e+00 : f32
    %6 = vector.broadcast %cst_5 : f32 to vector<8x32xf32>
    %7 = arith.maximumf %5, %6 : vector<8x32xf32>
    %c0_6 = arith.constant 0 : index
    %c0_7 = arith.constant 0 : index
    %8 = vector.load %arg4[%c0_6, %c0_7] : memref<32x32xf32, #tpu.memory_space<vmem>>, vector<32x32xf32>
    %cst_8 = arith.constant dense<0.000000e+00> : vector<8x32xf32>
    %9 = tpu.matmul %7, %8, %cst_8 {dimension_numbers = #tpu.dot_dimension_numbers<[1], [0], [0], [1], [0, 0, 1, 1], [], []>} : vector<8x32xf32>, vector<32x32xf32>, vector<8x32xf32> -> vector<8x32xf32>
    %c0_9 = arith.constant 0 : index
    %c0_10 = arith.constant 0 : index
    %10 = vector.load %arg5[%c0_9, %c0_10] : memref<1x32xf32, #tpu.memory_space<vmem>>, vector<1x32xf32>
    %11 = vector.broadcast %10 : vector<1x32xf32> to vector<8x32xf32>
    %12 = arith.addf %9, %11 : vector<8x32xf32>
    %cst_11 = arith.constant 0.000000e+00 : f32
    %13 = vector.broadcast %cst_11 : f32 to vector<8x32xf32>
    %14 = arith.maximumf %12, %13 : vector<8x32xf32>
    %c0_12 = arith.constant 0 : index
    %c0_13 = arith.constant 0 : index
    %15 = vector.load %arg6[%c0_12, %c0_13] : memref<32x16xf32, #tpu.memory_space<vmem>>, vector<32x16xf32>
    %cst_14 = arith.constant dense<0.000000e+00> : vector<8x16xf32>
    %16 = tpu.matmul %14, %15, %cst_14 {dimension_numbers = #tpu.dot_dimension_numbers<[1], [0], [0], [1], [0, 0, 1, 1], [], []>} : vector<8x32xf32>, vector<32x16xf32>, vector<8x16xf32> -> vector<8x16xf32>
    %c0_15 = arith.constant 0 : index
    %c0_16 = arith.constant 0 : index
    %17 = vector.load %arg7[%c0_15, %c0_16] : memref<1x16xf32, #tpu.memory_space<vmem>>, vector<1x16xf32>
    %18 = vector.broadcast %17 : vector<1x16xf32> to vector<8x16xf32>
    %19 = arith.addf %16, %18 : vector<8x16xf32>
    %c0_17 = arith.constant 0 : index
    %c0_18 = arith.constant 0 : index
    %20 = vector.load %arg8[%c0_17, %c0_18] : memref<8x16xf32, #tpu.memory_space<vmem>>, vector<8x16xf32>
    tpu.vector_store %arg8[%c0_17, %c0_18], %19 {strides = array<i32>} : memref<8x16xf32, #tpu.memory_space<vmem>>, vector<8x16xf32>,
    return
  }
  func.func @transform_0(%arg0: i32) -> (i32, i32) {
    %c0_i32 = arith.constant 0 : i32
    %c0_i32_0 = arith.constant 0 : i32
    return %arg0, %c0_i32 : i32, i32
  }
  func.func @transform_1(%arg0: i32) -> (i32, i32) {
    %c0_i32 = arith.constant 0 : i32
    %c0_i32_0 = arith.constant 0 : i32
    %c0_i32_1 = arith.constant 0 : i32
    return %c0_i32, %c0_i32_0 : i32, i32
  }
  func.func @transform_2(%arg0: i32) -> (i32, i32) {
    %c0_i32 = arith.constant 0 : i32
    %c0_i32_0 = arith.constant 0 : i32
    %c0_i32_1 = arith.constant 0 : i32
    return %c0_i32, %c0_i32_0 : i32, i32
  }
  func.func @transform_3(%arg0: i32) -> (i32, i32) {
    %c0_i32 = arith.constant 0 : i32
    %c0_i32_0 = arith.constant 0 : i32
    %c0_i32_1 = arith.constant 0 : i32
    return %c0_i32, %c0_i32_0 : i32, i32
  }
  func.func @transform_4(%arg0: i32) -> (i32, i32) {
    %c0_i32 = arith.constant 0 : i32
    %c0_i32_0 = arith.constant 0 : i32
    %c0_i32_1 = arith.constant 0 : i32
    return %c0_i32, %c0_i32_0 : i32, i32
  }
  func.func @transform_5(%arg0: i32) -> (i32, i32) {
    %c0_i32 = arith.constant 0 : i32
    %c0_i32_0 = arith.constant 0 : i32
    %c0_i32_1 = arith.constant 0 : i32
    return %c0_i32, %c0_i32_0 : i32, i32
  }
  func.func @transform_6(%arg0: i32) -> (i32, i32) {
    %c0_i32 = arith.constant 0 : i32
    %c0_i32_0 = arith.constant 0 : i32
    %c0_i32_1 = arith.constant 0 : i32
    return %c0_i32, %c0_i32_0 : i32, i32
  }
  func.func @transform_7(%arg0: i32) -> (i32, i32) {
    %c0_i32 = arith.constant 0 : i32
    %c0_i32_0 = arith.constant 0 : i32
    return %arg0, %c0_i32 : i32, i32
  }
}

</mosaic_0001>

<llo_original>
// kernel: tpu_custom_call.1
$region0: #{tpu_custom_call.1}
  #allocation0 [shape = 'u32[]', space=smem, size = 0x4, offset = 0x4, fixed_abs, tag = 'smem constant byte address 0x4 - core index']
  #allocation1 [shape = 'u32[72,128]{1,0:T(1,128)}', space=vmem, size = 0x9000, scoped, tag = 'internal scratch']
  %s0 = inlined_call_operand.vmem [shape: f32[8,32], index: 0, kind: input, shape index: {}]
  %s1 = inlined_call_operand.vmem [shape: f32[32,32], index: 1, kind: input, shape index: {}]
  %s2 = inlined_call_operand.vmem [shape: f32[1,32], index: 2, kind: input, shape index: {}]
  %s3 = inlined_call_operand.hbm [shape: f32[32,32], index: 3, kind: input, shape index: {}]
  %s4 = inlined_call_operand.vmem [shape: f32[1,32], index: 4, kind: input, shape index: {}]
  %s5 = inlined_call_operand.vmem [shape: f32[32,16], index: 5, kind: input, shape index: {}]
  %s6 = inlined_call_operand.vmem [shape: f32[1,16], index: 6, kind: input, shape index: {}]
  %s7 = inlined_call_operand.hbm [shape: f32[8,16], index: 7, kind: output, shape index: {}]
  %s8 = sld [smem:[#allocation0]]
  $region42: #{tpu_custom_call.1} parent=0
    _
  %s10 = ssub.s32 1, %s8
  %s11 = scalar_select 0, %s10, %s8
  $region1: #{tpu_custom_call.1} parent=0
    #allocation2 [shape = 'u8[16384]{0}', space=vmem, size = 0x4000, scoped, tag = 'input window, operand 3, single buffered']
    #allocation3 [shape = 's32[1]{0}', space=sflag, size = 0x4, scoped, tag = 'scoped memory for tpu_custom_call.1']
    #allocation4 [shape = 's32[1]{0}', space=sflag, size = 0x4, scoped, tag = 'scoped memory for tpu_custom_call.1']
    #allocation5 [shape = 'u8[4096]{0}', space=vmem, size = 0x1000, scoped, tag = 'output window, operand 0, single buffered']
    %12 = vsyncpa [#allocation3], 0
    %13 = vsyncpa [#allocation4], 0
    // Predicated region
    $region2: #{tpu_custom_call.1} parent=1 // pred_check
      _
    $region3: #{tpu_custom_call.1} parent=1 // pred_check_branch
      %15 = sbr.rel (0) target = $region5
    $region4: #{tpu_custom_call.1} parent=1 // pred_region
      _
    $region5: #{tpu_custom_call.1} parent=1 // pred_fallthru
      _
    // Predicated region
    $region6: #{tpu_custom_call.1} parent=1 // pred_check
      _
    $region7: #{tpu_custom_call.1} parent=1 // pred_check_branch
      %17 = sbr.rel (0) target = $region9
    $region8: #{tpu_custom_call.1} parent=1 // pred_region
      _
    $region9: #{tpu_custom_call.1} parent=1 // pred_fallthru
      _
    // Predicated region
    $region10: #{tpu_custom_call.1} parent=1 // pred_check
      _
    $region11: #{tpu_custom_call.1} parent=1 // pred_check_branch
      %19 = sbr.rel (0) target = $region13
    $region12: #{tpu_custom_call.1} parent=1 // pred_region
      _
    $region13: #{tpu_custom_call.1} parent=1 // pred_fallthru
      _
    // Predicated region
    $region14: #{tpu_custom_call.1} parent=1 // pred_check
      _
    $region15: #{tpu_custom_call.1} parent=1 // pred_check_branch
      %21 = sbr.rel (0) target = $region17
    $region16: #{tpu_custom_call.1} parent=1 // pred_region
      %23 = vsyncadd [#allocation3], 0
      %s24 = sshll.u32 %s3, 4
      %s25 = int_to_ptr.hbm [resolvable:$true] %s24
      %s26 = sshll.u32 [#allocation2], 4
      %s27 = int_to_ptr.vmem [resolvable:$true] %s26
      %32 = dma.hbm_to_vmem [thread:$0]  %s25, 512, %s27, [#allocation3], 128, 128, 8
    $region17: #{tpu_custom_call.1} parent=1 // pred_fallthru
      _
    // Predicated region
    $region18: #{tpu_custom_call.1} parent=1 // pred_check
      _
    $region19: #{tpu_custom_call.1} parent=1 // pred_check_branch
      %34 = sbr.rel (0) target = $region21
    $region20: #{tpu_custom_call.1} parent=1 // pred_region
      _
    $region21: #{tpu_custom_call.1} parent=1 // pred_fallthru
      _
    // Predicated region
    $region22: #{tpu_custom_call.1} parent=1 // pred_check
      _
    $region23: #{tpu_custom_call.1} parent=1 // pred_check_branch
      %36 = sbr.rel (0) target = $region25
    $region24: #{tpu_custom_call.1} parent=1 // pred_region
      _
    $region25: #{tpu_custom_call.1} parent=1 // pred_fallthru
      _
    // Predicated region
    $region26: #{tpu_custom_call.1} parent=1 // pred_check
      _
    $region27: #{tpu_custom_call.1} parent=1 // pred_check_branch
      %38 = sbr.rel (0) target = $region29
    $region28: #{tpu_custom_call.1} parent=1 // pred_region
      _
    $region29: #{tpu_custom_call.1} parent=1 // pred_fallthru
      _
    // Predicated region
    $region30: #{tpu_custom_call.1} parent=1 // pred_check
      _
    $region31: #{tpu_custom_call.1} parent=1 // pred_check_branch
      %40 = sbr.rel (0) target = $region33
    $region32: #{tpu_custom_call.1} parent=1 // pred_region
      %42 = dma.done [#allocation3], 512
    $region33: #{tpu_custom_call.1} parent=1 // pred_fallthru
      _
    %v43 = vld [vmem:[%s0] sm:$0xff]
    %v44 = vld [vmem:[%s1] sm:$0xff]
    %v45 = vld [vmem:[%s1 + $0x8] sm:$0xff]
    %v46 = vld [vmem:[%s1 + $0x10] sm:$0xff]
    %v47 = vld [vmem:[%s1 + $0x18] sm:$0xff]
    %v48 = vld [vmem:[%s2] sm:$0x1]
    %v50 = vperm.slane %v48, 0
    %vm52 = vcmask 261120
    %v54 = vsel %vm52, %v43, 0
    %56 = vmatpush.msra.mxu0 0.0
    %57 = vmatpush.msra.mxu0 0.0
    %58 = vmatpush.msra.mxu0 0.0
    %59 = vmatpush.msra.mxu0 0.0
    %60 = vmatpush.msra.mxu0 0.0
    %61 = vmatpush.msra.mxu0 0.0
    %62 = vmatpush.msra.mxu0 0.0
    %63 = vmatpush.msra.mxu0 0.0
    %64 = vmatpush.msra.mxu0 0.0
    %65 = vmatpush.msra.mxu0 0.0
    %66 = vmatpush.msra.mxu0 0.0
    %67 = vmatpush.msra.mxu0 0.0
    %68 = vmatpush.msra.mxu0 %v47
    %69 = vmatpush.msra.mxu0 %v46
    %70 = vmatpush.msra.mxu0 %v45
    %71 = vmatpush.msra.mxu0 %v44
    %72 = vmatmul.f32.gmra.mxu0 %v54
    %v73 = vpop.f32.mrf.mxu0
    %v74 = vadd.f32 %v50, %v73
    %75 = vdwg.mxu0
    %v76 = vmax.f32 %v74, 0.0
    %v77 = vld [vmem:[#allocation2] sm:$0xff]
    %v78 = vld [vmem:[#allocation2 + $0x8] sm:$0xff]
    %v79 = vld [vmem:[#allocation2 + $0x10] sm:$0xff]
    %v80 = vld [vmem:[#allocation2 + $0x18] sm:$0xff]
    %v81 = vld [vmem:[%s4] sm:$0x1]
    %v83 = vperm.slane %v81, 0
    %v86 = vsel %vm52, %v76, 0
    %88 = vmatpush.msra.mxu0 0.0
    %89 = vmatpush.msra.mxu0 0.0
    %90 = vmatpush.msra.mxu0 0.0
    %91 = vmatpush.msra.mxu0 0.0
    %92 = vmatpush.msra.mxu0 0.0
    %93 = vmatpush.msra.mxu0 0.0
    %94 = vmatpush.msra.mxu0 0.0
    %95 = vmatpush.msra.mxu0 0.0
    %96 = vmatpush.msra.mxu0 0.0
    %97 = vmatpush.msra.mxu0 0.0
    %98 = vmatpush.msra.mxu0 0.0
    %99 = vmatpush.msra.mxu0 0.0
    %100 = vmatpush.msra.mxu0 %v80
    %101 = vmatpush.msra.mxu0 %v79
    %102 = vmatpush.msra.mxu0 %v78
    %103 = vmatpush.msra.mxu0 %v77
    %104 = vmatmul.f32.gmra.mxu0 %v86
    %v105 = vpop.f32.mrf.mxu0
    %v106 = vadd.f32 %v83, %v105
    %107 = vdwg.mxu0
    %v108 = vmax.f32 %v106, 0.0
    %v109 = vld [vmem:[%s5] sm:$0xff]
    %v110 = vld [vmem:[%s5 + $0x8] sm:$0xff]
    %v111 = vld [vmem:[%s5 + $0x10] sm:$0xff]
    %v112 = vld [vmem:[%s5 + $0x18] sm:$0xff]
    %v113 = vld [vmem:[%s6] sm:$0x1]
    %v115 = vperm.slane %v113, 0
    %v118 = vsel %vm52, %v108, 0
    %120 = vmatpush.msra.mxu0 0.0
    %121 = vmatpush.msra.mxu0 0.0
    %122 = vmatpush.msra.mxu0 0.0
    %123 = vmatpush.msra.mxu0 0.0
    %124 = vmatpush.msra.mxu0 0.0
    %125 = vmatpush.msra.mxu0 0.0
    %126 = vmatpush.msra.mxu0 0.0
    %127 = vmatpush.msra.mxu0 0.0
    %128 = vmatpush.msra.mxu0 0.0
    %129 = vmatpush.msra.mxu0 0.0
    %130 = vmatpush.msra.mxu0 0.0
    %131 = vmatpush.msra.mxu0 0.0
    %132 = vmatpush.msra.mxu0 %v112
    %133 = vmatpush.msra.mxu0 %v111
    %134 = vmatpush.msra.mxu0 %v110
    %135 = vmatpush.msra.mxu0 %v109
    %136 = vmatmul.f32.gmra.mxu0 %v118
    %v137 = vpop.f32.mrf.mxu0
    %v138 = vadd.f32 %v115, %v137
    %139 = vdwg.mxu0
    %vm140 = vcmask 130048
    %141 = vst.msk [vmem:[#allocation5] sm:$0xff] %vm140, %v138
    // Predicated region
    $region34: #{tpu_custom_call.1} parent=1 // pred_check
      _
    $region35: #{tpu_custom_call.1} parent=1 // pred_check_branch
      %143 = sbr.rel (0) target = $region37
    $region36: #{tpu_custom_call.1} parent=1 // pred_region
      %145 = vsyncadd [#allocation4], 0
      %s147 = sshll.u32 [#allocation5], 4
      %s148 = int_to_ptr.vmem [resolvable:$true] %s147
      %s149 = sshll.u32 %s7, 4
      %s150 = int_to_ptr.hbm [resolvable:$true] %s149
      %152 = dma.vmem_to_hbm [thread:$0]  %s148, 128, %s150, [#allocation4]
    $region37: #{tpu_custom_call.1} parent=1 // pred_fallthru
      _
    // Predicated region
    $region38: #{tpu_custom_call.1} parent=1 // pred_check
      _
    $region39: #{tpu_custom_call.1} parent=1 // pred_check_branch
      %154 = sbr.rel (0) target = $region41
    $region40: #{tpu_custom_call.1} parent=1 // pred_region
      %156 = dma.done [#allocation4], 128
    $region41: #{tpu_custom_call.1} parent=1 // pred_fallthru
      _
    %157 = vsyncpa [#allocation3], 1
    %158 = vsyncpa [#allocation4], 1

</llo_original>
